<compile_context>
chip_gen: v7x
topology: tpu7x:2x2x1
jax: 0.10.0
libtpu: 0.0.40
codegen_flags: <defaults>
</compile_context>

<pallas_src>
import functools

import jax
import jax.numpy as jnp
from jax.experimental import pallas as pl
from jax.experimental.pallas import tpu as pltpu


def _tile_and_pad(dim, preferred):
    """Pick a tile size for `dim`; pad ragged large axes to a lane multiple."""
    for t in preferred:
        if dim % t == 0:
            return t, dim
    if dim < preferred[-1]:
        # Small axis: a full-extent block is legal and needs no padding.
        return dim, dim
    padded = ((dim + 127) // 128) * 128
    for t in preferred:
        if padded % t == 0:
            return t, padded
    return 128, padded  # padded is always a multiple of 128


def _pad_to(x, axis, size, value=0):
    pad = size - x.shape[axis]
    if pad <= 0:
        return x
    widths = [(0, 0)] * x.ndim
    widths[axis] = (0, pad)
    return jnp.pad(x, widths, constant_values=value)


def _flash_attn_kernel(q_ref, k_ref, v_ref, mask_ref, o_ref,
                       qs, m_i, l_i, acc, *, scale):
    # q_ref:    [1, H, TQ, D]   (matmul dtype)
    # k_ref:    [1, H, TK, D]
    # v_ref:    [1, H, TK, D]
    # mask_ref: [1, TQ, TK]     int8, nonzero => masked out; shared by all heads
    # o_ref:    [1, H, TQ, D]
    # scratch:  qs [H,TQ,D] (scaled Q, hoisted out of the kv loop),
    #           m_i/l_i [H,TQ,1] f32, acc [H,TQ,D] f32 — persist across the kv axis.
    kv = pl.program_id(2)

    @pl.when(kv == 0)
    def _init():
        # Scale Q once per (batch, q-tile) instead of once per kv step.
        qs[...] = q_ref[0] * scale
        m_i[...] = jnp.full(m_i.shape, -jnp.inf, dtype=m_i.dtype)
        l_i[...] = jnp.zeros(l_i.shape, dtype=l_i.dtype)
        acc[...] = jnp.zeros(acc.shape, dtype=acc.dtype)

    # scores = (Q*scale) @ K^T for every head of this batch element, without
    # materializing a K transpose; f32 accumulation on the MXU.
    s = jnp.einsum("hqd,hkd->hqk", qs[...], k_ref[0],
                   preferred_element_type=jnp.float32)          # [H, TQ, TK] f32

    # masked_fill(attn_mask, -1e9); one mask tile is shared by all H heads.
    masked = (mask_ref[0] != 0)[None, :, :]                     # [1, TQ, TK]
    s = jnp.where(masked, jnp.float32(-1000000000.0), s)

    # Online-softmax update.
    m_prev = m_i[...]
    m_new = jnp.maximum(m_prev, jnp.max(s, axis=-1, keepdims=True))
    alpha = jnp.exp(m_prev - m_new)
    p = jnp.exp(s - m_new)                                      # [H, TQ, TK] f32
    l_i[...] = alpha * l_i[...] + jnp.sum(p, axis=-1, keepdims=True)
    acc[...] = alpha * acc[...] + jnp.einsum(
        "hqk,hkd->hqd", p.astype(v_ref.dtype), v_ref[0],
        preferred_element_type=jnp.float32)
    m_i[...] = m_new

    @pl.when(kv == pl.num_programs(2) - 1)
    def _finalize():
        # Exact f32 normalization (once per Q tile; the approximate reciprocal
        # previously used here was the source of the reference mismatch).
        # TODO(synk): nn.Dropout(0.3) is identity in eval mode; training-mode
        # dropout (via pltpu.prng_random_bits) is intentionally not applied.
        o_ref[0] = (acc[...] / l_i[...]).astype(o_ref.dtype)


def scaled_dot_product_attention(Q, K, V, attn_mask, scale, *,
                                 matmul_dtype=jnp.bfloat16):
    """Q: [B,H,Mq,D], K/V: [B,H,Mk,D], attn_mask: [B,1,Mq,Mk] (nonzero = mask out).

    matmul_dtype: dtype fed to the MXU when inputs are f32 (bf16 runs the MXU
    at 3-4x the f32 rate; accumulation stays f32). Pass None for strict f32
    operand parity with the PyTorch module.
    """
    B, H, Mq, D = Q.shape
    Mk = K.shape[2]

    # MXU operand dtype: only downcast f32 inputs; bf16/f16 inputs stay native.
    if matmul_dtype is not None and Q.dtype == jnp.float32:
        op_dtype = matmul_dtype
    else:
        op_dtype = Q.dtype

    # Tile sizes and padded extents for ragged sequence lengths.
    TQ, Mq_pad = _tile_and_pad(Mq, (512, 256, 128))
    TK, Mk_pad = _tile_and_pad(Mk, (256, 128))   # keep TK modest (v5e note)

    q = _pad_to(Q.astype(op_dtype), 2, Mq_pad)
    k = _pad_to(K.astype(op_dtype), 2, Mk_pad)
    v = _pad_to(V.astype(op_dtype), 2, Mk_pad)
    # int8 mask (4x less HBM/VMEM than int32); padded keys/queries are marked
    # masked so they contribute exactly zero probability.
    mask_i8 = attn_mask.astype(jnp.int8).reshape(B, Mq, Mk)
    mask_i8 = _pad_to(_pad_to(mask_i8, 1, Mq_pad, value=1), 2, Mk_pad, value=1)

    kernel = functools.partial(_flash_attn_kernel, scale=float(scale))

    grid = (B, Mq_pad // TQ, Mk_pad // TK)
    grid_spec = pltpu.PrefetchScalarGridSpec(
        num_scalar_prefetch=0,
        grid=grid,
        in_specs=[
            pl.BlockSpec((1, H, TQ, D), lambda b, qi, ki: (b, 0, qi, 0)),   # Q
            pl.BlockSpec((1, H, TK, D), lambda b, qi, ki: (b, 0, ki, 0)),   # K
            pl.BlockSpec((1, H, TK, D), lambda b, qi, ki: (b, 0, ki, 0)),   # V
            pl.BlockSpec((1, TQ, TK),   lambda b, qi, ki: (b, qi, ki)),     # mask: 1 DMA / H heads
        ],
        out_specs=pl.BlockSpec((1, H, TQ, D), lambda b, qi, ki: (b, 0, qi, 0)),
        scratch_shapes=[
            pltpu.VMEM((H, TQ, D), op_dtype),     # qs : scaled Q (hoisted)
            pltpu.VMEM((H, TQ, 1), jnp.float32),  # m_i: running row max
            pltpu.VMEM((H, TQ, 1), jnp.float32),  # l_i: running denominator
            pltpu.VMEM((H, TQ, D), jnp.float32),  # acc: running numerator
        ],
    )

    out = pl.pallas_call(
        kernel,
        out_shape=jax.ShapeDtypeStruct((B, H, Mq_pad, D), Q.dtype),
        grid_spec=grid_spec,
        compiler_params=pltpu.CompilerParams(
            # Both leading axes parallel -> megacore / v7x 2-TC sharding has
            # work even when B is 1 or odd; kv reduction axis stays last.
            dimension_semantics=("parallel", "parallel", "arbitrary"),
            # Working set at TQ=512, TK=256 is a few MiB — well inside the
            # scoped VMEM limit on v5e/v6e/v7x (re-derive if tiles are raised).
            vmem_limit_bytes=32 * 1024 * 1024,
        ),
    )(q, k, v, mask_i8)

    if Mq_pad != Mq:
        out = out[:, :, :Mq, :]
    # TODO(synk): for D < 128 the final store is lane-masked; packing heads so
    # the written block's last dim is >=128 lanes ([B, Mq, H*D] layout) needs an
    # in-kernel (TQ,H,D)->(TQ,H*D) relayout that Mosaic may lower poorly, and
    # the store runs only once per Q tile — deferred. Likewise, for very large
    # H the per-program head group could be capped to bound the [H,TQ,TK]
    # score temporary.
    return out


def _reference(Q, K, V, attn_mask, scale):
    scores = jnp.einsum("bhqd,bhkd->bhqk", Q, K) * scale
    scores = jnp.where(attn_mask, -1000000000.0, scores)
    p = jax.nn.softmax(scores, axis=-1)
    return jnp.einsum("bhqk,bhkd->bhqd", p, V)


if __name__ == "__main__":
    B, H, Mq, Mk, D = 2, 4, 8, 8, 32
    key = jax.random.PRNGKey(0)
    kq, kk, kv, km = jax.random.split(key, 4)

    Q = jax.random.normal(kq, (B, H, Mq, D), dtype=jnp.float32)
    K = jax.random.normal(kk, (B, H, Mk, D), dtype=jnp.float32)
    V = jax.random.normal(kv, (B, H, Mk, D), dtype=jnp.float32)
    # boolean mask: True = masked out (e.g. padding); keep >=1 valid key per row
    attn_mask = jax.random.bernoulli(km, p=0.2, shape=(B, 1, Mq, Mk))
    attn_mask = attn_mask.at[..., 0].set(False)
    scale = 1.0 / float(D) ** 0.5

    ref = _reference(Q, K, V, attn_mask, scale)

    # Fast path (default): bf16 MXU operands, f32 accumulation. Tolerance
    # covers bf16 operand rounding (~1e-3..1e-2 absolute at these magnitudes).
    out = scaled_dot_product_attention(Q, K, V, attn_mask, scale)
    jax.block_until_ready(out)
    assert out.shape == ref.shape
    assert jnp.allclose(out, ref, atol=3e-2, rtol=3e-2), "bf16 path mismatch vs reference"

    # Strict path: f32 operands, exact normalization. Tolerance covers the
    # TPU MXU's f32-via-bf16-pass matmul precision (in both kernel and reference).
    out_f32 = scaled_dot_product_attention(Q, K, V, attn_mask, scale, matmul_dtype=None)
    jax.block_until_ready(out_f32)
    assert jnp.allclose(out_f32, ref, atol=1e-2, rtol=1e-2), "f32 path mismatch vs reference"

    print("KERNEL_OK")
</pallas_src>

<mosaic_0001>
module attributes {stable_mosaic.version = 11 : i64} {
  func.func @_flash_attn_kernel(%arg0: i32, %arg1: i32, %arg2: i32, %arg3: memref<1x4x8x32xbf16, #tpu.memory_space<vmem>>, %arg4: memref<1x4x8x32xbf16, #tpu.memory_space<vmem>>, %arg5: memref<1x4x8x32xbf16, #tpu.memory_space<vmem>>, %arg6: memref<1x8x8xi8, #tpu.memory_space<vmem>>, %arg7: memref<1x4x8x32xf32, #tpu.memory_space<vmem>>, %arg8: memref<4x8x32xbf16, #tpu.memory_space<vmem>>, %arg9: memref<4x8x1xf32, #tpu.memory_space<vmem>>, %arg10: memref<4x8x1xf32, #tpu.memory_space<vmem>>, %arg11: memref<4x8x32xf32, #tpu.memory_space<vmem>>) attributes {dimension_semantics = [#tpu.dimension_semantics<parallel>, #tpu.dimension_semantics<parallel>, #tpu.dimension_semantics<arbitrary>], iteration_bounds = array<i64: 2, 1, 1>, scalar_prefetch = 0 : i64, scratch_operands = 4 : i64, tpu.core_type = #tpu.core_type<tc>, window_params = [{transform_indices = @transform_0, window_bounds = array<i64: 1, 4, 8, 32>}, {transform_indices = @transform_1, window_bounds = array<i64: 1, 4, 8, 32>}, {transform_indices = @transform_2, window_bounds = array<i64: 1, 4, 8, 32>}, {transform_indices = @transform_3, window_bounds = array<i64: 1, 8, 8>}, {transform_indices = @transform_4, window_bounds = array<i64: 1, 4, 8, 32>}]} {
    %c0_i32 = arith.constant 0 : i32
    %0 = arith.cmpi eq, %arg2, %c0_i32 : i32
    %1 = arith.extui %0 : i1 to i32
    %c0_i32_0 = arith.constant 0 : i32
    %2 = arith.cmpi ne, %1, %c0_i32_0 : i32
    scf.if %2 {
      %c0_38 = arith.constant 0 : index
      %c0_39 = arith.constant 0 : index
      %c0_40 = arith.constant 0 : index
      %c0_41 = arith.constant 0 : index
      %44 = vector.load %arg3[%c0_38, %c0_39, %c0_40, %c0_41] : memref<1x4x8x32xbf16, #tpu.memory_space<vmem>>, vector<1x4x8x32xbf16>
      %45 = vector.shape_cast %44 : vector<1x4x8x32xbf16> to vector<4x8x32xbf16>
      %cst_42 = arith.constant 1.767580e-01 : bf16
      %46 = vector.broadcast %cst_42 : bf16 to vector<4x8x32xbf16>
      %47 = arith.mulf %45, %46 : vector<4x8x32xbf16>
      %c0_43 = arith.constant 0 : index
      %c0_44 = arith.constant 0 : index
      %c0_45 = arith.constant 0 : index
      %48 = vector.load %arg8[%c0_43, %c0_44, %c0_45] : memref<4x8x32xbf16, #tpu.memory_space<vmem>>, vector<4x8x32xbf16>
      tpu.vector_store %arg8[%c0_43, %c0_44, %c0_45], %47 {strides = array<i32>} : memref<4x8x32xbf16, #tpu.memory_space<vmem>>, vector<4x8x32xbf16>,
      %cst_46 = arith.constant 0xFF800000 : f32
      %49 = vector.broadcast %cst_46 : f32 to vector<4x8x1xf32>
      %c0_47 = arith.constant 0 : index
      %c0_48 = arith.constant 0 : index
      %c0_49 = arith.constant 0 : index
      %50 = vector.load %arg9[%c0_47, %c0_48, %c0_49] : memref<4x8x1xf32, #tpu.memory_space<vmem>>, vector<4x8x1xf32>
      tpu.vector_store %arg9[%c0_47, %c0_48, %c0_49], %49 {strides = array<i32>} : memref<4x8x1xf32, #tpu.memory_space<vmem>>, vector<4x8x1xf32>,
      %cst_50 = arith.constant 0.000000e+00 : f32
      %51 = vector.broadcast %cst_50 : f32 to vector<4x8x1xf32>
      %c0_51 = arith.constant 0 : index
      %c0_52 = arith.constant 0 : index
      %c0_53 = arith.constant 0 : index
      %52 = vector.load %arg10[%c0_51, %c0_52, %c0_53] : memref<4x8x1xf32, #tpu.memory_space<vmem>>, vector<4x8x1xf32>
      tpu.vector_store %arg10[%c0_51, %c0_52, %c0_53], %51 {strides = array<i32>} : memref<4x8x1xf32, #tpu.memory_space<vmem>>, vector<4x8x1xf32>,
      %cst_54 = arith.constant 0.000000e+00 : f32
      %53 = vector.broadcast %cst_54 : f32 to vector<4x8x32xf32>
      %c0_55 = arith.constant 0 : index
      %c0_56 = arith.constant 0 : index
      %c0_57 = arith.constant 0 : index
      %54 = vector.load %arg11[%c0_55, %c0_56, %c0_57] : memref<4x8x32xf32, #tpu.memory_space<vmem>>, vector<4x8x32xf32>
      tpu.vector_store %arg11[%c0_55, %c0_56, %c0_57], %53 {strides = array<i32>} : memref<4x8x32xf32, #tpu.memory_space<vmem>>, vector<4x8x32xf32>,
    } else {
    }
    %c0 = arith.constant 0 : index
    %c0_1 = arith.constant 0 : index
    %c0_2 = arith.constant 0 : index
    %3 = vector.load %arg8[%c0, %c0_1, %c0_2] : memref<4x8x32xbf16, #tpu.memory_space<vmem>>, vector<4x8x32xbf16>
    %c0_3 = arith.constant 0 : index
    %c0_4 = arith.constant 0 : index
    %c0_5 = arith.constant 0 : index
    %c0_6 = arith.constant 0 : index
    %4 = vector.load %arg4[%c0_3, %c0_4, %c0_5, %c0_6] : memref<1x4x8x32xbf16, #tpu.memory_space<vmem>>, vector<1x4x8x32xbf16>
    %5 = vector.shape_cast %4 : vector<1x4x8x32xbf16> to vector<4x8x32xbf16>
    "tpu.trace_start"() <{level = 10 : i32, message = "hqd,hkd->hqk"}> : () -> ()
    %cst = arith.constant dense<0.000000e+00> : vector<4x8x8xf32>
    %6 = tpu.matmul %3, %5, %cst {dimension_numbers = #tpu.dot_dimension_numbers<[2], [2], [1], [1], [0, 0, 0, 1, 1, 1], [0], [0]>} : vector<4x8x32xbf16>, vector<4x8x32xbf16>, vector<4x8x8xf32> -> vector<4x8x8xf32>
    "tpu.trace_stop"() : () -> ()
    %c0_7 = arith.constant 0 : index
    %c0_8 = arith.constant 0 : index
    %c0_9 = arith.constant 0 : index
    %7 = vector.load %arg6[%c0_7, %c0_8, %c0_9] : memref<1x8x8xi8, #tpu.memory_space<vmem>>, vector<1x8x8xi8>
    %8 = vector.shape_cast %7 : vector<1x8x8xi8> to vector<8x8xi8>
    %c0_i8 = arith.constant 0 : i8
    %9 = vector.broadcast %c0_i8 : i8 to vector<8x8xi8>
    %10 = arith.cmpi ne, %8, %9 : vector<8x8xi8>
    %11 = vector.shape_cast %10 : vector<8x8xi1> to vector<1x8x8xi1>
    %cst_10 = arith.constant -1.000000e+09 : f32
    %12 = vector.shape_cast %11 : vector<1x8x8xi1> to vector<1x8x8xi1>
    %13 = vector.broadcast %12 : vector<1x8x8xi1> to vector<4x8x8xi1>
    %14 = vector.broadcast %cst_10 : f32 to vector<4x8x8xf32>
    %15 = arith.select %13, %14, %6 : vector<4x8x8xi1>, vector<4x8x8xf32>
    %c0_11 = arith.constant 0 : index
    %c0_12 = arith.constant 0 : index
    %c0_13 = arith.constant 0 : index
    %16 = vector.load %arg9[%c0_11, %c0_12, %c0_13] : memref<4x8x1xf32, #tpu.memory_space<vmem>>, vector<4x8x1xf32>
    %cst_14 = arith.constant dense<0xFF800000> : vector<4x8xf32>
    %17 = vector.multi_reduction <maximumf>, %15, %cst_14 [2] : vector<4x8x8xf32> to vector<4x8xf32>
    %18 = vector.shape_cast %17 : vector<4x8xf32> to vector<4x8x1xf32>
    %19 = arith.maximumf %16, %18 : vector<4x8x1xf32>
    %20 = arith.subf %16, %19 : vector<4x8x1xf32>
    %21 = math.exp %20 : vector<4x8x1xf32>
    %22 = vector.broadcast %19 : vector<4x8x1xf32> to vector<4x8x8xf32>
    %23 = arith.subf %15, %22 : vector<4x8x8xf32>
    %24 = math.exp %23 : vector<4x8x8xf32>
    %c0_15 = arith.constant 0 : index
    %c0_16 = arith.constant 0 : index
    %c0_17 = arith.constant 0 : index
    %25 = vector.load %arg10[%c0_15, %c0_16, %c0_17] : memref<4x8x1xf32, #tpu.memory_space<vmem>>, vector<4x8x1xf32>
    %26 = arith.mulf %21, %25 : vector<4x8x1xf32>
    %cst_18 = arith.constant dense<0.000000e+00> : vector<4x8xf32>
    %27 = vector.multi_reduction <add>, %24, %cst_18 [2] : vector<4x8x8xf32> to vector<4x8xf32>
    %28 = vector.shape_cast %27 : vector<4x8xf32> to vector<4x8x1xf32>
    %29 = arith.addf %26, %28 : vector<4x8x1xf32>
    %c0_19 = arith.constant 0 : index
    %c0_20 = arith.constant 0 : index
    %c0_21 = arith.constant 0 : index
    %30 = vector.load %arg10[%c0_19, %c0_20, %c0_21] : memref<4x8x1xf32, #tpu.memory_space<vmem>>, vector<4x8x1xf32>
    tpu.vector_store %arg10[%c0_19, %c0_20, %c0_21], %29 {strides = array<i32>} : memref<4x8x1xf32, #tpu.memory_space<vmem>>, vector<4x8x1xf32>,
    %c0_22 = arith.constant 0 : index
    %c0_23 = arith.constant 0 : index
    %c0_24 = arith.constant 0 : index
    %31 = vector.load %arg11[%c0_22, %c0_23, %c0_24] : memref<4x8x32xf32, #tpu.memory_space<vmem>>, vector<4x8x32xf32>
    %32 = vector.broadcast %21 : vector<4x8x1xf32> to vector<4x8x32xf32>
    %33 = arith.mulf %32, %31 : vector<4x8x32xf32>
    %34 = arith.truncf %24 : vector<4x8x8xf32> to vector<4x8x8xbf16>
    %c0_25 = arith.constant 0 : index
    %c0_26 = arith.constant 0 : index
    %c0_27 = arith.constant 0 : index
    %c0_28 = arith.constant 0 : index
    %35 = vector.load %arg5[%c0_25, %c0_26, %c0_27, %c0_28] : memref<1x4x8x32xbf16, #tpu.memory_space<vmem>>, vector<1x4x8x32xbf16>
    %36 = vector.shape_cast %35 : vector<1x4x8x32xbf16> to vector<4x8x32xbf16>
    "tpu.trace_start"() <{level = 10 : i32, message = "hqk,hkd->hqd"}> : () -> ()
    %cst_29 = arith.constant dense<0.000000e+00> : vector<4x8x32xf32>
    %37 = tpu.matmul %34, %36, %cst_29 {dimension_numbers = #tpu.dot_dimension_numbers<[2], [1], [1], [2], [0, 0, 0, 1, 1, 2], [0], [0]>} : vector<4x8x8xbf16>, vector<4x8x32xbf16>, vector<4x8x32xf32> -> vector<4x8x32xf32>
    "tpu.trace_stop"() : () -> ()
    %38 = arith.addf %33, %37 : vector<4x8x32xf32>
    %c0_30 = arith.constant 0 : index
    %c0_31 = arith.constant 0 : index
    %c0_32 = arith.constant 0 : index
    %39 = vector.load %arg11[%c0_30, %c0_31, %c0_32] : memref<4x8x32xf32, #tpu.memory_space<vmem>>, vector<4x8x32xf32>
    tpu.vector_store %arg11[%c0_30, %c0_31, %c0_32], %38 {strides = array<i32>} : memref<4x8x32xf32, #tpu.memory_space<vmem>>, vector<4x8x32xf32>,
    %c0_33 = arith.constant 0 : index
    %c0_34 = arith.constant 0 : index
    %c0_35 = arith.constant 0 : index
    %40 = vector.load %arg9[%c0_33, %c0_34, %c0_35] : memref<4x8x1xf32, #tpu.memory_space<vmem>>, vector<4x8x1xf32>
    tpu.vector_store %arg9[%c0_33, %c0_34, %c0_35], %19 {strides = array<i32>} : memref<4x8x1xf32, #tpu.memory_space<vmem>>, vector<4x8x1xf32>,
    %c0_i32_36 = arith.constant 0 : i32
    %41 = arith.cmpi eq, %arg2, %c0_i32_36 : i32
    %42 = arith.extui %41 : i1 to i32
    %c0_i32_37 = arith.constant 0 : i32
    %43 = arith.cmpi ne, %42, %c0_i32_37 : i32
    scf.if %43 {
      %c0_38 = arith.constant 0 : index
      %c0_39 = arith.constant 0 : index
      %c0_40 = arith.constant 0 : index
      %44 = vector.load %arg11[%c0_38, %c0_39, %c0_40] : memref<4x8x32xf32, #tpu.memory_space<vmem>>, vector<4x8x32xf32>
      %c0_41 = arith.constant 0 : index
      %c0_42 = arith.constant 0 : index
      %c0_43 = arith.constant 0 : index
      %45 = vector.load %arg10[%c0_41, %c0_42, %c0_43] : memref<4x8x1xf32, #tpu.memory_space<vmem>>, vector<4x8x1xf32>
      %46 = vector.broadcast %45 : vector<4x8x1xf32> to vector<4x8x32xf32>
      %47 = arith.divf %44, %46 : vector<4x8x32xf32>
      %c0_44 = arith.constant 0 : index
      %c0_45 = arith.constant 0 : index
      %c0_46 = arith.constant 0 : index
      %c0_47 = arith.constant 0 : index
      %48 = vector.load %arg7[%c0_44, %c0_45, %c0_46, %c0_47] : memref<1x4x8x32xf32, #tpu.memory_space<vmem>>, vector<1x4x8x32xf32>
      %49 = vector.shape_cast %48 : vector<1x4x8x32xf32> to vector<4x8x32xf32>
      %50 = vector.shape_cast %47 : vector<4x8x32xf32> to vector<1x4x8x32xf32>
      tpu.vector_store %arg7[%c0_44, %c0_45, %c0_46, %c0_47], %50 {strides = array<i32>} : memref<1x4x8x32xf32, #tpu.memory_space<vmem>>, vector<1x4x8x32xf32>,
    } else {
    }
    return
  }
  func.func @transform_0(%arg0: i32, %arg1: i32, %arg2: i32) -> (i32, i32, i32, i32) {
    %c0_i32 = arith.constant 0 : i32
    %c0_i32_0 = arith.constant 0 : i32
    %c0_i32_1 = arith.constant 0 : i32
    return %arg0, %c0_i32, %arg1, %c0_i32_0 : i32, i32, i32, i32
  }
  func.func @transform_1(%arg0: i32, %arg1: i32, %arg2: i32) -> (i32, i32, i32, i32) {
    %c0_i32 = arith.constant 0 : i32
    %c0_i32_0 = arith.constant 0 : i32
    %c0_i32_1 = arith.constant 0 : i32
    return %arg0, %c0_i32, %arg2, %c0_i32_0 : i32, i32, i32, i32
  }
  func.func @transform_2(%arg0: i32, %arg1: i32, %arg2: i32) -> (i32, i32, i32, i32) {
    %c0_i32 = arith.constant 0 : i32
    %c0_i32_0 = arith.constant 0 : i32
    %c0_i32_1 = arith.constant 0 : i32
    return %arg0, %c0_i32, %arg2, %c0_i32_0 : i32, i32, i32, i32
  }
  func.func @transform_3(%arg0: i32, %arg1: i32, %arg2: i32) -> (i32, i32, i32) {
    %c0_i32 = arith.constant 0 : i32
    return %arg0, %arg1, %arg2 : i32, i32, i32
  }
  func.func @transform_4(%arg0: i32, %arg1: i32, %arg2: i32) -> (i32, i32, i32, i32) {
    %c0_i32 = arith.constant 0 : i32
    %c0_i32_0 = arith.constant 0 : i32
    %c0_i32_1 = arith.constant 0 : i32
    return %arg0, %c0_i32, %arg1, %c0_i32_0 : i32, i32, i32, i32
  }
}

</mosaic_0001>

<llo_original>
// kernel: tpu_custom_call.1
$region0: #{tpu_custom_call.1}
  #allocation0 [shape = 'u32[]', space=smem, size = 0x4, offset = 0x4, fixed_abs, tag = 'smem constant byte address 0x4 - core index']
  #allocation1 [shape = 'u32[144,128]{1,0:T(1,128)}', space=vmem, size = 0x12000, scoped, tag = 'internal scratch']
  #allocation2 [shape = 'bf16[4,8,32]{2,1,0:T(8,128)(2,1)}', space=vmem, size = 0x2000, scoped, tag = 'scratch operand']
  #allocation3 [shape = 'f32[4,8,1]{2,1,0:T(8,128)}', space=vmem, size = 0x4000, scoped, tag = 'scratch operand']
  #allocation4 [shape = 'f32[4,8,1]{2,1,0:T(8,128)}', space=vmem, size = 0x4000, scoped, tag = 'scratch operand']
  #allocation5 [shape = 'f32[4,8,32]{2,1,0:T(8,128)}', space=vmem, size = 0x4000, scoped, tag = 'scratch operand']
  %s0 = inlined_call_operand.hbm [shape: bf16[2,4,8,32], index: 0, kind: input, shape index: {}]
  %s1 = inlined_call_operand.hbm [shape: bf16[2,4,8,32], index: 1, kind: input, shape index: {}]
  %s2 = inlined_call_operand.hbm [shape: bf16[2,4,8,32], index: 2, kind: input, shape index: {}]
  %s3 = inlined_call_operand.vmem [shape: s8[2,8,8], index: 3, kind: input, shape index: {}]
  %s4 = inlined_call_operand.hbm [shape: f32[2,4,8,32], index: 4, kind: output, shape index: {}]
  %s5 = sld [smem:[#allocation0]]
  $region69: #{tpu_custom_call.1} parent=0
    _
  %s7 = ssub.s32 1, %s5
  %s8 = scalar_select 0, %s7, %s5
  $region1: #{tpu_custom_call.1} parent=0
    #allocation6 [shape = 'u8[16384]{0}', space=vmem, size = 0x4000, scoped, tag = 'input window, operand 0']
    #allocation7 [shape = 's32[2]{0}', space=sflag, size = 0x8, scoped, tag = 'scoped memory for tpu_custom_call.1']
    #allocation8 [shape = 's32[2]{0}', space=sflag, size = 0x8, scoped, tag = 'scoped memory for tpu_custom_call.1']
    #allocation9 [shape = 'u8[16384]{0}', space=vmem, size = 0x4000, scoped, tag = 'input window, operand 1']
    #allocation10 [shape = 's32[2]{0}', space=sflag, size = 0x8, scoped, tag = 'scoped memory for tpu_custom_call.1']
    #allocation11 [shape = 'u8[16384]{0}', space=vmem, size = 0x4000, scoped, tag = 'input window, operand 2']
    #allocation12 [shape = 'u8[32768]{0}', space=vmem, size = 0x8000, scoped, tag = 'output window, operand 0']
    %9 = vsyncpa [#allocation7], 0
    %s10 = scalar_lea.sflag [#allocation7], 1
    %11 = vsyncpa %s10, 0
    %12 = vsyncpa [#allocation10], 0
    %s13 = scalar_lea.sflag [#allocation10], 1
    %14 = vsyncpa %s13, 0
    %15 = vsyncpa [#allocation8], 0
    %s16 = scalar_lea.sflag [#allocation8], 1
    %17 = vsyncpa %s16, 0
    loop: start=0, step=1, limit=4
    $region2: #{tpu_custom_call.1} parent=1 // loop_pre_header
      _
    $region3: #{tpu_custom_call.1} parent=1 // loop_header
      %s19 = sphi 0, %s23
      %p20 = scmp.ge.s32.totalorder %s19, 4
      %s26 = sphi 0, %s45
      %s27 = sphi 0, %s41
      %s28 = sphi 0, %s37
      %s29 = sphi 0, %s26
      %s30 = sphi 0, %s27
      %s31 = sphi 0, %s28
      %s32 = sphi 0, %s29
      %s33 = sphi 0, %s30
      %s34 = sphi 0, %s31
      %s50 = sphi 0, %s52
      %s53 = sphi 0, %s50
      %s54 = sphi 0, %s53
      %s70 = sphi 0, %s54
      %s78 = sphi 0, %s80
      %s81 = sphi 0, %s78
      %s82 = sphi 0, %s81
      %s98 = sphi 0, %s82
      %s106 = sphi 0, %s108
      %s109 = sphi 0, %s106
      %s110 = sphi 0, %s109
      %s126 = sphi 0, %s110
      %s136 = sphi 0, %s138
      %s139 = sphi 0, %s136
      %s140 = sphi 0, %s139
      %s156 = sphi 0, %s140
      %s164 = sphi 0, %s166
      %s167 = sphi 0, %s164
      %s168 = sphi 0, %s167
      %s184 = sphi 0, %s168
    $region4: #{tpu_custom_call.1} parent=1 // loop_header_branch
      %22 = sbr.rel (%p20) target = $region8
    $region5: #{tpu_custom_call.1} parent=1 // loop_body
      %s24 = ssub.s32 %s19, 1
      %s25 = ssub.s32 %s19, 2
      %s35 = sadd.s32 1, %s28
      %p36 = scmp.ge.s32.totalorder %s35, 1
      %s37 = scalar_select %p36, 0, %s35
      %s38 = sadd.s32 1, %s27
      %s39 = scalar_select %p36, %s38, %s27
      %p40 = scmp.ge.s32.totalorder %s39, 1
      %s41 = scalar_select %p40, 0, %s39
      %s42 = sadd.s32 1, %s26
      %s43 = scalar_select %p40, %s42, %s26
      %p44 = scmp.ge.s32.totalorder %s43, 2
      %s45 = scalar_select %p44, 0, %s43
      %s46 = ssub.s32 %s26, %s45
      %s47 = ssub.s32 %s27, %s41
      %s48 = sor.u32 %s46, %s47
      %p49 = scmp.eq.s32.totalorder %s48, 0
      %s51 = sadd.s32 %s50, 1
      %s52 = scalar_select %p49, %s50, %s51
      %p55 = pneg %p49
      %p56 = scmp.eq.s32.totalorder %s19, 1
      %p57 = por %p55, %p56
      %p58 = scmp.ne.s32.totalorder %s50, %s53
      %p59 = scmp.eq.s32.totalorder %s19, 0
      %p60 = por %p58, %p59
      %p61 = scmp.ne.s32.totalorder %s50, %s53
      %p62 = scmp.eq.s32.totalorder %s24, 1
      %p63 = por %p61, %p62
      %p64 = scmp.ne.s32.totalorder %s53, %s54
      %p65 = scmp.eq.s32.totalorder %s24, 0
      %p66 = por %p64, %p65
      %p67 = scmp.ne.s32.totalorder %s53, %s54
      %p68 = scmp.eq.s32.totalorder %s25, 1
      %p69 = por %p67, %p68
      %p71 = scmp.ne.s32.totalorder %s54, %s70
      %p72 = scmp.eq.s32.totalorder %s25, 0
      %p73 = por %p71, %p72
      %s74 = ssub.s32 %s26, %s45
      %s75 = ssub.s32 %s28, %s37
      %s76 = sor.u32 %s74, %s75
      %p77 = scmp.eq.s32.totalorder %s76, 0
      %s79 = sadd.s32 %s78, 1
      %s80 = scalar_select %p77, %s78, %s79
      %p83 = pneg %p77
      %p84 = scmp.eq.s32.totalorder %s19, 1
      %p85 = por %p83, %p84
      %p86 = scmp.ne.s32.totalorder %s78, %s81
      %p87 = scmp.eq.s32.totalorder %s19, 0
      %p88 = por %p86, %p87
      %p89 = scmp.ne.s32.totalorder %s78, %s81
      %p90 = scmp.eq.s32.totalorder %s24, 1
      %p91 = por %p89, %p90
      %p92 = scmp.ne.s32.totalorder %s81, %s82
      %p93 = scmp.eq.s32.totalorder %s24, 0
      %p94 = por %p92, %p93
      %p95 = scmp.ne.s32.totalorder %s81, %s82
      %p96 = scmp.eq.s32.totalorder %s25, 1
      %p97 = por %p95, %p96
      %p99 = scmp.ne.s32.totalorder %s82, %s98
      %p100 = scmp.eq.s32.totalorder %s25, 0
      %p101 = por %p99, %p100
      %s102 = ssub.s32 %s26, %s45
      %s103 = ssub.s32 %s28, %s37
      %s104 = sor.u32 %s102, %s103
      %p105 = scmp.eq.s32.totalorder %s104, 0
      %s107 = sadd.s32 %s106, 1
      %s108 = scalar_select %p105, %s106, %s107
      %p111 = pneg %p105
      %p112 = scmp.eq.s32.totalorder %s19, 1
      %p113 = por %p111, %p112
      %p114 = scmp.ne.s32.totalorder %s106, %s109
      %p115 = scmp.eq.s32.totalorder %s19, 0
      %p116 = por %p114, %p115
      %p117 = scmp.ne.s32.totalorder %s106, %s109
      %p118 = scmp.eq.s32.totalorder %s24, 1
      %p119 = por %p117, %p118
      %p120 = scmp.ne.s32.totalorder %s109, %s110
      %p121 = scmp.eq.s32.totalorder %s24, 0
      %p122 = por %p120, %p121
      %p123 = scmp.ne.s32.totalorder %s109, %s110
      %p124 = scmp.eq.s32.totalorder %s25, 1
      %p125 = por %p123, %p124
      %p127 = scmp.ne.s32.totalorder %s110, %s126
      %p128 = scmp.eq.s32.totalorder %s25, 0
      %p129 = por %p127, %p128
      %s130 = ssub.s32 %s26, %s45
      %s131 = ssub.s32 %s27, %s41
      %s132 = sor.u32 %s130, %s131
      %s133 = ssub.s32 %s28, %s37
      %s134 = sor.u32 %s132, %s133
      %p135 = scmp.eq.s32.totalorder %s134, 0
      %s137 = sadd.s32 %s136, 1
      %s138 = scalar_select %p135, %s136, %s137
      %p141 = pneg %p135
      %p142 = scmp.eq.s32.totalorder %s19, 1
      %p143 = por %p141, %p142
      %p144 = scmp.ne.s32.totalorder %s136, %s139
      %p145 = scmp.eq.s32.totalorder %s19, 0
      %p146 = por %p144, %p145
      %p147 = scmp.ne.s32.totalorder %s136, %s139
      %p148 = scmp.eq.s32.totalorder %s24, 1
      %p149 = por %p147, %p148
      %p150 = scmp.ne.s32.totalorder %s139, %s140
      %p151 = scmp.eq.s32.totalorder %s24, 0
      %p152 = por %p150, %p151
      %p153 = scmp.ne.s32.totalorder %s139, %s140
      %p154 = scmp.eq.s32.totalorder %s25, 1
      %p155 = por %p153, %p154
      %p157 = scmp.ne.s32.totalorder %s140, %s156
      %p158 = scmp.eq.s32.totalorder %s25, 0
      %p159 = por %p157, %p158
      %s160 = ssub.s32 %s26, %s45
      %s161 = ssub.s32 %s27, %s41
      %s162 = sor.u32 %s160, %s161
      %p163 = scmp.eq.s32.totalorder %s162, 0
      %s165 = sadd.s32 %s164, 1
      %s166 = scalar_select %p163, %s164, %s165
      %p169 = pneg %p163
      %p170 = scmp.eq.s32.totalorder %s19, 1
      %p171 = por %p169, %p170
      %p172 = scmp.ne.s32.totalorder %s164, %s167
      %p173 = scmp.eq.s32.totalorder %s19, 0
      %p174 = por %p172, %p173
      %p175 = scmp.ne.s32.totalorder %s164, %s167
      %p176 = scmp.eq.s32.totalorder %s24, 1
      %p177 = por %p175, %p176
      %p178 = scmp.ne.s32.totalorder %s167, %s168
      %p179 = scmp.eq.s32.totalorder %s24, 0
      %p180 = por %p178, %p179
      %p181 = scmp.ne.s32.totalorder %s167, %s168
      %p182 = scmp.eq.s32.totalorder %s25, 1
      %p183 = por %p181, %p182
      %p185 = scmp.ne.s32.totalorder %s168, %s184
      %p186 = scmp.eq.s32.totalorder %s25, 0
      %p187 = por %p185, %p186
      %p188 = scmp.le.s32.totalorder 1, %s19
      %p189 = scmp.lt.s32.totalorder %s19, 3
      %p190 = pnand %p188, %p189
      %p191 = pneg %p190
      // Predicated region
      $region9: #{tpu_custom_call.1} parent=5 // pred_check
        _
      $region10: #{tpu_custom_call.1} parent=5 // pred_check_branch
        %193 = sbr.rel (%p190) target = $region12
      $region11: #{tpu_custom_call.1} parent=5 // pred_region
        %s194 = ssub.s32 %s19, 1
      $region12: #{tpu_custom_call.1} parent=5 // pred_fallthru
        _
      %p195 = scmp.lt.s32.totalorder %s19, 2
      // Predicated region
      $region13: #{tpu_custom_call.1} parent=5 // pred_check
        %p196 = pneg %p195
      $region14: #{tpu_custom_call.1} parent=5 // pred_check_branch
        %198 = sbr.rel (%p196) target = $region16
      $region15: #{tpu_custom_call.1} parent=5 // pred_region
        // Predicated region
        $region17: #{tpu_custom_call.1} parent=15 // pred_check
          %p199 = pneg %p60
        $region18: #{tpu_custom_call.1} parent=15 // pred_check_branch
          %201 = sbr.rel (%p199) target = $region20
        $region19: #{tpu_custom_call.1} parent=15 // pred_region
          %s202 = sand.u32 %s50, 1
          %s203 = scalar_lea.sflag [#allocation7], %s202
          %s204 = sand.u32 %s50, 1
          %s205 = smul.addr %s204, 16
          %s206 = scalar_lea.vmem [#allocation6], %s205
          %s208 = ssub.s32 256, 256
          %209 = vsyncadd %s203, %s208
          %s210 = smul.addr %s26, 4
          %s211 = sadd.s32 %s27, %s210
          %s212 = smul.addr %s211, 64
          %s213 = scalar_lea.hbm %s0, %s212
          %s214 = sshll.u32 %s206, 4
          %s215 = int_to_ptr.vmem [resolvable:$true] %s214
          %220 = dma.hbm_to_vmem [thread:$0]  %s213, 256, %s215, %s203, 64, 64, 4
        $region20: #{tpu_custom_call.1} parent=15 // pred_fallthru
          _
        // Predicated region
        $region21: #{tpu_custom_call.1} parent=15 // pred_check
          %p221 = pneg %p88
        $region22: #{tpu_custom_call.1} parent=15 // pred_check_branch
          %223 = sbr.rel (%p221) target = $region24
        $region23: #{tpu_custom_call.1} parent=15 // pred_region
          %s224 = sand.u32 %s19, 1
          %s225 = scalar_lea.sflag [#allocation10], %s224
          %s226 = sand.u32 %s78, 1
          %s227 = smul.addr %s226, 16
          %s228 = scalar_lea.vmem [#allocation9], %s227
          %s230 = ssub.s32 256, 256
          %231 = vsyncadd %s225, %s230
          %s232 = smul.addr %s26, 4
          %s233 = sadd.s32 %s28, %s232
          %s234 = smul.addr %s233, 64
          %s235 = scalar_lea.hbm %s1, %s234
          %s236 = sshll.u32 %s228, 4
          %s237 = int_to_ptr.vmem [resolvable:$true] %s236
          %242 = dma.hbm_to_vmem [thread:$0]  %s235, 256, %s237, %s225, 64, 64, 4
        $region24: #{tpu_custom_call.1} parent=15 // pred_fallthru
          _
        // Predicated region
        $region25: #{tpu_custom_call.1} parent=15 // pred_check
          %p243 = pneg %p116
        $region26: #{tpu_custom_call.1} parent=15 // pred_check_branch
          %245 = sbr.rel (%p243) target = $region28
        $region27: #{tpu_custom_call.1} parent=15 // pred_region
          %s246 = sand.u32 %s19, 1
          %s247 = scalar_lea.sflag [#allocation10], %s246
          %s248 = sand.u32 %s106, 1
          %s249 = smul.addr %s248, 16
          %s250 = scalar_lea.vmem [#allocation11], %s249
          %s252 = ssub.s32 256, 256
          %253 = vsyncadd %s247, %s252
          %s254 = smul.addr %s26, 4
          %s255 = sadd.s32 %s28, %s254
          %s256 = smul.addr %s255, 64
          %s257 = scalar_lea.hbm %s2, %s256
          %s258 = sshll.u32 %s250, 4
          %s259 = int_to_ptr.vmem [resolvable:$true] %s258
          %264 = dma.hbm_to_vmem [thread:$0]  %s257, 256, %s259, %s247, 64, 64, 4
        $region28: #{tpu_custom_call.1} parent=15 // pred_fallthru
          _
        // Predicated region
        $region29: #{tpu_custom_call.1} parent=15 // pred_check
          %p265 = pneg %p146
        $region30: #{tpu_custom_call.1} parent=15 // pred_check_branch
          %267 = sbr.rel (%p265) target = $region32
        $region31: #{tpu_custom_call.1} parent=15 // pred_region
          %p268 = scmp.lt.s32.totalorder %s26, 1
          %s269 = scalar_select %p268, %s26, 1
          %p270 = scmp.lt.s32.totalorder %s27, 0
          %s271 = scalar_select %p270, %s27, 0
          %p272 = scmp.lt.s32.totalorder %s28, 0
          %s273 = scalar_select %p272, %s28, 0
          %s274 = sadd.s32 %s273, %s271
          %s275 = sadd.s32 %s274, %s269
          %s276 = smul.addr %s275, 2
          %s277 = scalar_lea.vmem %s3, %s276
        $region32: #{tpu_custom_call.1} parent=15 // pred_fallthru
          _
      $region16: #{tpu_custom_call.1} parent=5 // pred_fallthru
        _
      %p278 = scmp.le.s32.totalorder 1, %s19
      %p279 = scmp.lt.s32.totalorder %s19, 3
      %p280 = pnand %p278, %p279
      %p281 = pneg %p280
      // Predicated region
      $region33: #{tpu_custom_call.1} parent=5 // pred_check
        _
      $region34: #{tpu_custom_call.1} parent=5 // pred_check_branch
        %283 = sbr.rel (%p280) target = $region36
      $region35: #{tpu_custom_call.1} parent=5 // pred_region
        %s284 = ssub.s32 %s19, 1
        %s285 = sand.u32 %s53, 1
        %s286 = scalar_lea.sflag [#allocation7], %s285
        %s287 = sand.u32 %s53, 1
        %s288 = smul.addr %s287, 16
        %s289 = scalar_lea.vmem [#allocation6], %s288
        // Predicated region
        $region37: #{tpu_custom_call.1} parent=35 // pred_check
          %p290 = pneg %p66
        $region38: #{tpu_custom_call.1} parent=35 // pred_check_branch
          %292 = sbr.rel (%p290) target = $region40
        $region39: #{tpu_custom_call.1} parent=35 // pred_region
          %293 = dma.done %s286, 256
        $region40: #{tpu_custom_call.1} parent=35 // pred_fallthru
          _
        %s294 = sand.u32 %s24, 1
        %s295 = scalar_lea.sflag [#allocation10], %s294
        %s296 = sand.u32 %s81, 1
        %s297 = smul.addr %s296, 16
        %s298 = scalar_lea.vmem [#allocation9], %s297
        // Predicated region
        $region41: #{tpu_custom_call.1} parent=35 // pred_check
          %p299 = pneg %p94
        $region42: #{tpu_custom_call.1} parent=35 // pred_check_branch
          %301 = sbr.rel (%p299) target = $region44
        $region43: #{tpu_custom_call.1} parent=35 // pred_region
          %302 = dma.done %s295, 256
        $region44: #{tpu_custom_call.1} parent=35 // pred_fallthru
          _
        %s303 = sand.u32 %s24, 1
        %s304 = scalar_lea.sflag [#allocation10], %s303
        %s305 = sand.u32 %s109, 1
        %s306 = smul.addr %s305, 16
        %s307 = scalar_lea.vmem [#allocation11], %s306
        // Predicated region
        $region45: #{tpu_custom_call.1} parent=35 // pred_check
          %p308 = pneg %p122
        $region46: #{tpu_custom_call.1} parent=35 // pred_check_branch
          %310 = sbr.rel (%p308) target = $region48
        $region47: #{tpu_custom_call.1} parent=35 // pred_region
          %311 = dma.done %s304, 256
        $region48: #{tpu_custom_call.1} parent=35 // pred_fallthru
          _
        %s312 = sand.u32 %s53, 1
        %s313 = scalar_lea.sflag [#allocation7], %s312
        %s314 = sand.u32 %s53, 1
        %s315 = smul.addr %s314, 16
        %s316 = scalar_lea.vmem [#allocation6], %s315
        %p317 = pneg %p66
        %p318 = pneg %p63
        %s319 = sand.u32 %s24, 1
        %s320 = scalar_lea.sflag [#allocation10], %s319
        %s321 = sand.u32 %s81, 1
        %s322 = smul.addr %s321, 16
        %s323 = scalar_lea.vmem [#allocation9], %s322
        %p324 = pneg %p94
        %p325 = pneg %p91
        %s326 = sand.u32 %s24, 1
        %s327 = scalar_lea.sflag [#allocation10], %s326
        %s328 = sand.u32 %s109, 1
        %s329 = smul.addr %s328, 16
        %s330 = scalar_lea.vmem [#allocation11], %s329
        %p331 = pneg %p122
        %p332 = pneg %p119
        %p333 = scmp.lt.s32.totalorder %s29, 1
        %s334 = scalar_select %p333, %s29, 1
        %p335 = scmp.lt.s32.totalorder %s30, 0
        %s336 = scalar_select %p335, %s30, 0
        %p337 = scmp.lt.s32.totalorder %s31, 0
        %s338 = scalar_select %p337, %s31, 0
        %s339 = sadd.s32 %s338, %s336
        %s340 = sadd.s32 %s339, %s334
        %s341 = smul.addr %s340, 2
        %s342 = scalar_lea.vmem %s3, %s341
        %p343 = pneg %p152
        %p344 = pneg %p149
        %p345 = pneg %p180
        %p346 = pneg %p177
        %s347 = sand.u32 %s167, 1
        %s348 = scalar_lea.sflag [#allocation8], %s347
        %s349 = sand.u32 %s167, 1
        %s350 = smul.addr %s349, 32
        %s351 = scalar_lea.vmem [#allocation12], %s350
        %p352 = scmp.lt.s32.totalorder %s29, 1
        %s353 = scalar_select %p352, %s29, 1
        %p354 = scmp.lt.s32.totalorder %s30, 0
        %s355 = scalar_select %p354, %s30, 0
        %p356 = scmp.lt.s32.totalorder %s31, 0
        %s357 = scalar_select %p356, %s31, 0
        %s358 = sadd.s32 %s357, %s355
        %s359 = sadd.s32 %s358, %s353
        %s360 = smul.addr %s359, 2
        %s361 = scalar_lea.vmem %s3, %s360
        %p366 = scmp.eq.s32.totalorder %s31, 0
        // Predicated region
        $region49: #{tpu_custom_call.1} parent=35 // pred_check
          %p367 = pneg %p366
        $region50: #{tpu_custom_call.1} parent=35 // pred_check_branch
          %369 = sbr.rel (%p367) target = $region52
        $region51: #{tpu_custom_call.1} parent=35 // pred_region
          %v370 = vld [vmem:[%s289] sm:$0xf]
          %v371 = vld [vmem:[%s289 + $0x4] sm:$0xf]
          %v372 = vld [vmem:[%s289 + $0x8] sm:$0xf]
          %v373 = vld [vmem:[%s289 + $0xc] sm:$0xf]
          %v374 = vmul.bf16 %v370, 1043676725
          %v375 = vmul.bf16 %v371, 1043676725
          %v376 = vmul.bf16 %v372, 1043676725
          %v377 = vmul.bf16 %v373, 1043676725
          %vm378 = vcmask 257024
          %379 = vst.msk [vmem:[#allocation2] sm:$0xf] %vm378, %v374
          %380 = vst.msk [vmem:[#allocation2 + $0x4] sm:$0xf] %vm378, %v375
          %381 = vst.msk [vmem:[#allocation2 + $0x8] sm:$0xf] %vm378, %v376
          %382 = vst.msk [vmem:[#allocation2 + $0xc] sm:$0xf] %vm378, %v377
          %vm383 = vcmask 7168
          %384 = vst.msk [vmem:[#allocation3] sm:$0xff] %vm383, -inf
          %385 = vst.msk [vmem:[#allocation3 + $0x8] sm:$0xff] %vm383, -inf
          %386 = vst.msk [vmem:[#allocation3 + $0x10] sm:$0xff] %vm383, -inf
          %387 = vst.msk [vmem:[#allocation3 + $0x18] sm:$0xff] %vm383, -inf
          %388 = vst.msk [vmem:[#allocation4] sm:$0xff] %vm383, 0.0
          %389 = vst.msk [vmem:[#allocation4 + $0x8] sm:$0xff] %vm383, 0.0
          %390 = vst.msk [vmem:[#allocation4 + $0x10] sm:$0xff] %vm383, 0.0
          %391 = vst.msk [vmem:[#allocation4 + $0x18] sm:$0xff] %vm383, 0.0
          %vm392 = vcmask 261120
          %393 = vst.msk [vmem:[#allocation5] sm:$0xff] %vm392, 0.0
          %394 = vst.msk [vmem:[#allocation5 + $0x8] sm:$0xff] %vm392, 0.0
          %395 = vst.msk [vmem:[#allocation5 + $0x10] sm:$0xff] %vm392, 0.0
          %396 = vst.msk [vmem:[#allocation5 + $0x18] sm:$0xff] %vm392, 0.0
        $region52: #{tpu_custom_call.1} parent=35 // pred_fallthru
          _
        %v397 = vld [vmem:[#allocation2] sm:$0xf]
        %v398 = vld [vmem:[#allocation2 + $0x4] sm:$0xf]
        %v399 = vld [vmem:[#allocation2 + $0x8] sm:$0xf]
        %v400 = vld [vmem:[#allocation2 + $0xc] sm:$0xf]
        %v401 = vld [vmem:[%s298] sm:$0xf]
        %v402 = vld [vmem:[%s298 + $0x4] sm:$0xf]
        %v403 = vld [vmem:[%s298 + $0x8] sm:$0xf]
        %v404 = vld [vmem:[%s298 + $0xc] sm:$0xf]
        %vm405 = vcmask 261120
        %v407 = vsel %vm405, %v397, 0
        %v410 = vsel %vm405, %v401, 0
        %412 = vmatprep.subr.bf16.mxu0 0
        %413 = vmatpush1.bf16.xpose.msra.mxu0 %v410
        %414 = vmatprep.subr.bf16.mxu0 0
        %415 = vmatpush1.bf16.xpose.msra.mxu0 0
        %416 = vmatprep.subr.bf16.mxu0 0
        %417 = vmatpush1.bf16.xpose.msra.mxu0 0
        %418 = vmatprep.subr.bf16.mxu0 0
        %419 = vmatpush1.bf16.xpose.msra.mxu0 0
        %420 = vmatprep.subr.bf16.mxu0 0
        %421 = vmatpush1.bf16.xpose.msra.mxu0 0
        %422 = vmatprep.subr.bf16.mxu0 0
        %423 = vmatpush1.bf16.xpose.msra.mxu0 0
        %424 = vmatprep.subr.bf16.mxu0 0
        %425 = vmatpush1.bf16.xpose.msra.mxu0 0
        %426 = vmatprep.subr.bf16.mxu0 0
        %427 = vmatpush1.bf16.xpose.msra.mxu0 0
        %428 = vmatprep.subr.bf16.mxu0 0
        %429 = vmatpush1.bf16.xpose.msra.mxu0 0
        %430 = vmatprep.subr.bf16.mxu0 0
        %431 = vmatpush1.bf16.xpose.msra.mxu0 0
        %432 = vmatprep.subr.bf16.mxu0 0
        %433 = vmatpush1.bf16.xpose.msra.mxu0 0
        %434 = vmatprep.subr.bf16.mxu0 0
        %435 = vmatpush1.bf16.xpose.msra.mxu0 0
        %436 = vmatprep.subr.bf16.mxu0 0
        %437 = vmatpush1.bf16.xpose.msra.mxu0 0
        %438 = vmatprep.subr.bf16.mxu0 0
        %439 = vmatpush1.bf16.xpose.msra.mxu0 0
        %440 = vmatprep.subr.bf16.mxu0 0
        %441 = vmatpush1.bf16.xpose.msra.mxu0 0
        %442 = vmatprep.subr.bf16.mxu0 0
        %443 = vmatpush1.bf16.xpose.msra.mxu0 0
        %444 = vmatprep.mubr.bf16.mxu0 0
        %445 = vmatmul.mubr.bf16.gmra.mrb[0].mxu0 %v407
        %v446 = vpop.f32.mrb[0].mxu0
        %v447 = vadd.f32 0.0, %v446
        %v448 = vpop.f32.mrb[0].mxu0
        %v449 = vpop.f32.mrb[0].mxu0
        %v450 = vpop.f32.mrb[0].mxu0
        %451 = vdwg.mxu0
        %v453 = vsel %vm405, %v398, 0
        %v456 = vsel %vm405, %v402, 0
        %458 = vmatprep.subr.bf16.mxu0 0
        %459 = vmatpush1.bf16.xpose.msra.mxu0 %v456
        %460 = vmatprep.subr.bf16.mxu0 0
        %461 = vmatpush1.bf16.xpose.msra.mxu0 0
        %462 = vmatprep.subr.bf16.mxu0 0
        %463 = vmatpush1.bf16.xpose.msra.mxu0 0
        %464 = vmatprep.subr.bf16.mxu0 0
        %465 = vmatpush1.bf16.xpose.msra.mxu0 0
        %466 = vmatprep.subr.bf16.mxu0 0
        %467 = vmatpush1.bf16.xpose.msra.mxu0 0
        %468 = vmatprep.subr.bf16.mxu0 0
        %469 = vmatpush1.bf16.xpose.msra.mxu0 0
        %470 = vmatprep.subr.bf16.mxu0 0
        %471 = vmatpush1.bf16.xpose.msra.mxu0 0
        %472 = vmatprep.subr.bf16.mxu0 0
        %473 = vmatpush1.bf16.xpose.msra.mxu0 0
        %474 = vmatprep.subr.bf16.mxu0 0
        %475 = vmatpush1.bf16.xpose.msra.mxu0 0
        %476 = vmatprep.subr.bf16.mxu0 0
        %477 = vmatpush1.bf16.xpose.msra.mxu0 0
        %478 = vmatprep.subr.bf16.mxu0 0
        %479 = vmatpush1.bf16.xpose.msra.mxu0 0
        %480 = vmatprep.subr.bf16.mxu0 0
        %481 = vmatpush1.bf16.xpose.msra.mxu0 0
        %482 = vmatprep.subr.bf16.mxu0 0
        %483 = vmatpush1.bf16.xpose.msra.mxu0 0
        %484 = vmatprep.subr.bf16.mxu0 0
        %485 = vmatpush1.bf16.xpose.msra.mxu0 0
        %486 = vmatprep.subr.bf16.mxu0 0
        %487 = vmatpush1.bf16.xpose.msra.mxu0 0
        %488 = vmatprep.subr.bf16.mxu0 0
        %489 = vmatpush1.bf16.xpose.msra.mxu0 0
        %490 = vmatprep.mubr.bf16.mxu0 0
        %491 = vmatmul.mubr.bf16.gmra.mrb[0].mxu0 %v453
        %v492 = vpop.f32.mrb[0].mxu0
        %v493 = vadd.f32 0.0, %v492
        %v494 = vpop.f32.mrb[0].mxu0
        %v495 = vpop.f32.mrb[0].mxu0
        %v496 = vpop.f32.mrb[0].mxu0
        %497 = vdwg.mxu0
        %v499 = vsel %vm405, %v399, 0
        %v502 = vsel %vm405, %v403, 0
        %504 = vmatprep.subr.bf16.mxu0 0
        %505 = vmatpush1.bf16.xpose.msra.mxu0 %v502
        %506 = vmatprep.subr.bf16.mxu0 0
        %507 = vmatpush1.bf16.xpose.msra.mxu0 0
        %508 = vmatprep.subr.bf16.mxu0 0
        %509 = vmatpush1.bf16.xpose.msra.mxu0 0
        %510 = vmatprep.subr.bf16.mxu0 0
        %511 = vmatpush1.bf16.xpose.msra.mxu0 0
        %512 = vmatprep.subr.bf16.mxu0 0
        %513 = vmatpush1.bf16.xpose.msra.mxu0 0
        %514 = vmatprep.subr.bf16.mxu0 0
        %515 = vmatpush1.bf16.xpose.msra.mxu0 0
        %516 = vmatprep.subr.bf16.mxu0 0
        %517 = vmatpush1.bf16.xpose.msra.mxu0 0
        %518 = vmatprep.subr.bf16.mxu0 0
        %519 = vmatpush1.bf16.xpose.msra.mxu0 0
        %520 = vmatprep.subr.bf16.mxu0 0
        %521 = vmatpush1.bf16.xpose.msra.mxu0 0
        %522 = vmatprep.subr.bf16.mxu0 0
        %523 = vmatpush1.bf16.xpose.msra.mxu0 0
        %524 = vmatprep.subr.bf16.mxu0 0
        %525 = vmatpush1.bf16.xpose.msra.mxu0 0
        %526 = vmatprep.subr.bf16.mxu0 0
        %527 = vmatpush1.bf16.xpose.msra.mxu0 0
        %528 = vmatprep.subr.bf16.mxu0 0
        %529 = vmatpush1.bf16.xpose.msra.mxu0 0
        %530 = vmatprep.subr.bf16.mxu0 0
        %531 = vmatpush1.bf16.xpose.msra.mxu0 0
        %532 = vmatprep.subr.bf16.mxu0 0
        %533 = vmatpush1.bf16.xpose.msra.mxu0 0
        %534 = vmatprep.subr.bf16.mxu0 0
        %535 = vmatpush1.bf16.xpose.msra.mxu0 0
        %536 = vmatprep.mubr.bf16.mxu0 0
        %537 = vmatmul.mubr.bf16.gmra.mrb[0].mxu0 %v499
        %v538 = vpop.f32.mrb[0].mxu0
        %v539 = vadd.f32 0.0, %v538
        %v540 = vpop.f32.mrb[0].mxu0
        %v541 = vpop.f32.mrb[0].mxu0
        %v542 = vpop.f32.mrb[0].mxu0
        %543 = vdwg.mxu0
        %v545 = vsel %vm405, %v400, 0
        %v548 = vsel %vm405, %v404, 0
        %550 = vmatprep.subr.bf16.mxu0 0
        %551 = vmatpush1.bf16.xpose.msra.mxu0 %v548
        %552 = vmatprep.subr.bf16.mxu0 0
        %553 = vmatpush1.bf16.xpose.msra.mxu0 0
        %554 = vmatprep.subr.bf16.mxu0 0
        %555 = vmatpush1.bf16.xpose.msra.mxu0 0
        %556 = vmatprep.subr.bf16.mxu0 0
        %557 = vmatpush1.bf16.xpose.msra.mxu0 0
        %558 = vmatprep.subr.bf16.mxu0 0
        %559 = vmatpush1.bf16.xpose.msra.mxu0 0
        %560 = vmatprep.subr.bf16.mxu0 0
        %561 = vmatpush1.bf16.xpose.msra.mxu0 0
        %562 = vmatprep.subr.bf16.mxu0 0
        %563 = vmatpush1.bf16.xpose.msra.mxu0 0
        %564 = vmatprep.subr.bf16.mxu0 0
        %565 = vmatpush1.bf16.xpose.msra.mxu0 0
        %566 = vmatprep.subr.bf16.mxu0 0
        %567 = vmatpush1.bf16.xpose.msra.mxu0 0
        %568 = vmatprep.subr.bf16.mxu0 0
        %569 = vmatpush1.bf16.xpose.msra.mxu0 0
        %570 = vmatprep.subr.bf16.mxu0 0
        %571 = vmatpush1.bf16.xpose.msra.mxu0 0
        %572 = vmatprep.subr.bf16.mxu0 0
        %573 = vmatpush1.bf16.xpose.msra.mxu0 0
        %574 = vmatprep.subr.bf16.mxu0 0
        %575 = vmatpush1.bf16.xpose.msra.mxu0 0
        %576 = vmatprep.subr.bf16.mxu0 0
        %577 = vmatpush1.bf16.xpose.msra.mxu0 0
        %578 = vmatprep.subr.bf16.mxu0 0
        %579 = vmatpush1.bf16.xpose.msra.mxu0 0
        %580 = vmatprep.subr.bf16.mxu0 0
        %581 = vmatpush1.bf16.xpose.msra.mxu0 0
        %582 = vmatprep.mubr.bf16.mxu0 0
        %583 = vmatmul.mubr.bf16.gmra.mrb[0].mxu0 %v545
        %v584 = vpop.f32.mrb[0].mxu0
        %v585 = vadd.f32 0.0, %v584
        %v586 = vpop.f32.mrb[0].mxu0
        %v587 = vpop.f32.mrb[0].mxu0
        %v588 = vpop.f32.mrb[0].mxu0
        %589 = vdwg.mxu0
        %v590 = vld [vmem:[%s361] sm:$0x3]
        %vm591 = vnez %v590
        %v592 = vsel %vm591, 16843009, 0
        %v593 = vunpack.c.0.s8 %v592
        %vm594 = vcmp.ne.s32.totalorder %v593, 0
        %v595 = vsel %vm594, 1, 0
        %vm596 = vcmp.eq.s32.totalorder %v595, 1
        %v597 = vsel %vm596, -1e+09, %v447
        %v598 = vsel %vm596, -1e+09, %v493
        %v599 = vsel %vm596, -1e+09, %v539
        %v600 = vsel %vm596, -1e+09, %v585
        %v601 = vld [vmem:[#allocation3] sm:$0xff]
        %v602 = vld [vmem:[#allocation3 + $0x8] sm:$0xff]
        %v603 = vld [vmem:[#allocation3 + $0x10] sm:$0xff]
        %v604 = vld [vmem:[#allocation3 + $0x18] sm:$0xff]
        %vm605 = vcmask 64512
        %v606 = vsel %vm605, %v597, -inf
        %607 = vmax.xlane.f32.xlu0 %v606
        %v608 = vpop.xlane.xlu0 %607
        %v609 = vsel %vm605, %v598, -inf
        %610 = vmax.xlane.f32.xlu0 %v609
        %v611 = vpop.xlane.xlu0 %610
        %v612 = vsel %vm605, %v599, -inf
        %613 = vmax.xlane.f32.xlu0 %v612
        %v614 = vpop.xlane.xlu0 %613
        %v615 = vsel %vm605, %v600, -inf
        %616 = vmax.xlane.f32.xlu0 %v615
        %v617 = vpop.xlane.xlu0 %616
        %v618 = vmax.f32 %v601, %v608
        %v619 = vmax.f32 %v602, %v611
        %v620 = vmax.f32 %v603, %v614
        %v621 = vmax.f32 %v604, %v617
        %v622 = vsub.f32 %v601, %v618
        %v623 = vsub.f32 %v602, %v619
        %v624 = vsub.f32 %v603, %v620
        %v625 = vsub.f32 %v604, %v621
        %v626 = vmul.f32 %v622, 1.442695
        %v627 = vpow.pop %v626
        %v628 = vmul.f32 %v623, 1.442695
        %v629 = vpow.pop %v628
        %v630 = vmul.f32 %v624, 1.442695
        %v631 = vpow.pop %v630
        %v632 = vmul.f32 %v625, 1.442695
        %v633 = vpow.pop %v632
        %635 = vset.pattern.permute.xlu0 0
        %636 = vperm.xlu0 %635, %v618
        %v637 = vpop.permute.xlu0 %636
        %640 = vset.pattern.permute.xlu0 0
        %641 = vperm.xlu0 %640, %v619
        %v642 = vpop.permute.xlu0 %641
        %645 = vset.pattern.permute.xlu0 0
        %646 = vperm.xlu0 %645, %v620
        %v647 = vpop.permute.xlu0 %646
        %650 = vset.pattern.permute.xlu0 0
        %651 = vperm.xlu0 %650, %v621
        %v652 = vpop.permute.xlu0 %651
        %v654 = vsub.f32 %v597, %v637
        %v655 = vsub.f32 %v598, %v642
        %v656 = vsub.f32 %v599, %v647
        %v657 = vsub.f32 %v600, %v652
        %v658 = vmul.f32 %v654, 1.442695
        %v659 = vpow.pop %v658
        %v660 = vmul.f32 %v655, 1.442695
        %v661 = vpow.pop %v660
        %v662 = vmul.f32 %v656, 1.442695
        %v663 = vpow.pop %v662
        %v664 = vmul.f32 %v657, 1.442695
        %v665 = vpow.pop %v664
        %v666 = vld [vmem:[#allocation4] sm:$0xff]
        %v667 = vld [vmem:[#allocation4 + $0x8] sm:$0xff]
        %v668 = vld [vmem:[#allocation4 + $0x10] sm:$0xff]
        %v669 = vld [vmem:[#allocation4 + $0x18] sm:$0xff]
        %v670 = vmul.f32 %v627, %v666
        %v671 = vmul.f32 %v629, %v667
        %v672 = vmul.f32 %v631, %v668
        %v673 = vmul.f32 %v633, %v669
        %v674 = vsel %vm605, %v659, 0.0
        %675 = vadd.xlane.f32.xlu0 %v674
        %v676 = vpop.xlane.xlu0 %675
        %v677 = vsel %vm605, %v661, 0.0
        %678 = vadd.xlane.f32.xlu0 %v677
        %v679 = vpop.xlane.xlu0 %678
        %v680 = vsel %vm605, %v663, 0.0
        %681 = vadd.xlane.f32.xlu0 %v680
        %v682 = vpop.xlane.xlu0 %681
        %v683 = vsel %vm605, %v665, 0.0
        %684 = vadd.xlane.f32.xlu0 %v683
        %v685 = vpop.xlane.xlu0 %684
        %v686 = vadd.f32 %v670, %v676
        %v687 = vadd.f32 %v671, %v679
        %v688 = vadd.f32 %v672, %v682
        %v689 = vadd.f32 %v673, %v685
        %vm690 = vcmask 7168
        %691 = vst.msk [vmem:[#allocation4] sm:$0xff] %vm690, %v686
        %692 = vst.msk [vmem:[#allocation4 + $0x8] sm:$0xff] %vm690, %v687
        %693 = vst.msk [vmem:[#allocation4 + $0x10] sm:$0xff] %vm690, %v688
        %694 = vst.msk [vmem:[#allocation4 + $0x18] sm:$0xff] %vm690, %v689
        %v695 = vld [vmem:[#allocation5] sm:$0xff]
        %v696 = vld [vmem:[#allocation5 + $0x8] sm:$0xff]
        %v697 = vld [vmem:[#allocation5 + $0x10] sm:$0xff]
        %v698 = vld [vmem:[#allocation5 + $0x18] sm:$0xff]
        %700 = vset.pattern.permute.xlu0 0
        %701 = vperm.xlu0 %700, %v627
        %v702 = vpop.permute.xlu0 %701
        %705 = vset.pattern.permute.xlu0 0
        %706 = vperm.xlu0 %705, %v629
        %v707 = vpop.permute.xlu0 %706
        %710 = vset.pattern.permute.xlu0 0
        %711 = vperm.xlu0 %710, %v631
        %v712 = vpop.permute.xlu0 %711
        %715 = vset.pattern.permute.xlu0 0
        %716 = vperm.xlu0 %715, %v633
        %v717 = vpop.permute.xlu0 %716
        %v719 = vmul.f32 %v702, %v695
        %v720 = vmul.f32 %v707, %v696
        %v721 = vmul.f32 %v712, %v697
        %v722 = vmul.f32 %v717, %v698
        %v723 = vpack.c.bf16 %v659, %v659
        %v724 = vpack.c.bf16 %v661, %v661
        %v725 = vpack.c.bf16 %v663, %v663
        %v726 = vpack.c.bf16 %v665, %v665
        %v727 = vld [vmem:[%s307] sm:$0xf]
        %v728 = vld [vmem:[%s307 + $0x4] sm:$0xf]
        %v729 = vld [vmem:[%s307 + $0x8] sm:$0xf]
        %v730 = vld [vmem:[%s307 + $0xc] sm:$0xf]
        %v732 = vsel %vm605, %v723, 0
        %vm734 = vcmask 1043456
        %v736 = vsel %vm734, %v727, 0
        %738 = vmatprep.subr.bf16.mxu0 0
        %739 = vmatpush1.bf16.msra.mxu0 %v736
        %740 = vmatprep.subr.bf16.mxu0 0
        %741 = vmatpush1.bf16.msra.mxu0 0
        %742 = vmatprep.subr.bf16.mxu0 0
        %743 = vmatpush1.bf16.msra.mxu0 0
        %744 = vmatprep.subr.bf16.mxu0 0
        %745 = vmatpush1.bf16.msra.mxu0 0
        %746 = vmatprep.subr.bf16.mxu0 0
        %747 = vmatpush1.bf16.msra.mxu0 0
        %748 = vmatprep.subr.bf16.mxu0 0
        %749 = vmatpush1.bf16.msra.mxu0 0
        %750 = vmatprep.subr.bf16.mxu0 0
        %751 = vmatpush1.bf16.msra.mxu0 0
        %752 = vmatprep.subr.bf16.mxu0 0
        %753 = vmatpush1.bf16.msra.mxu0 0
        %754 = vmatprep.subr.bf16.mxu0 0
        %755 = vmatpush1.bf16.msra.mxu0 0
        %756 = vmatprep.subr.bf16.mxu0 0
        %757 = vmatpush1.bf16.msra.mxu0 0
        %758 = vmatprep.subr.bf16.mxu0 0
        %759 = vmatpush1.bf16.msra.mxu0 0
        %760 = vmatprep.subr.bf16.mxu0 0
        %761 = vmatpush1.bf16.msra.mxu0 0
        %762 = vmatprep.subr.bf16.mxu0 0
        %763 = vmatpush1.bf16.msra.mxu0 0
        %764 = vmatprep.subr.bf16.mxu0 0
        %765 = vmatpush1.bf16.msra.mxu0 0
        %766 = vmatprep.subr.bf16.mxu0 0
        %767 = vmatpush1.bf16.msra.mxu0 0
        %768 = vmatprep.subr.bf16.mxu0 0
        %769 = vmatpush1.bf16.msra.mxu0 0
        %770 = vmatprep.mubr.bf16.mxu0 0
        %771 = vmatmul.mubr.bf16.gmra.mrb[0].mxu0 %v732
        %v772 = vpop.f32.mrb[0].mxu0
        %v773 = vadd.f32 0.0, %v772
        %v774 = vpop.f32.mrb[0].mxu0
        %v775 = vpop.f32.mrb[0].mxu0
        %v776 = vpop.f32.mrb[0].mxu0
        %777 = vdwg.mxu0
        %v779 = vsel %vm605, %v724, 0
        %v782 = vsel %vm734, %v728, 0
        %784 = vmatprep.subr.bf16.mxu0 0
        %785 = vmatpush1.bf16.msra.mxu0 %v782
        %786 = vmatprep.subr.bf16.mxu0 0
        %787 = vmatpush1.bf16.msra.mxu0 0
        %788 = vmatprep.subr.bf16.mxu0 0
        %789 = vmatpush1.bf16.msra.mxu0 0
        %790 = vmatprep.subr.bf16.mxu0 0
        %791 = vmatpush1.bf16.msra.mxu0 0
        %792 = vmatprep.subr.bf16.mxu0 0
        %793 = vmatpush1.bf16.msra.mxu0 0
        %794 = vmatprep.subr.bf16.mxu0 0
        %795 = vmatpush1.bf16.msra.mxu0 0
        %796 = vmatprep.subr.bf16.mxu0 0
        %797 = vmatpush1.bf16.msra.mxu0 0
        %798 = vmatprep.subr.bf16.mxu0 0
        %799 = vmatpush1.bf16.msra.mxu0 0
        %800 = vmatprep.subr.bf16.mxu0 0
        %801 = vmatpush1.bf16.msra.mxu0 0
        %802 = vmatprep.subr.bf16.mxu0 0
        %803 = vmatpush1.bf16.msra.mxu0 0
        %804 = vmatprep.subr.bf16.mxu0 0
        %805 = vmatpush1.bf16.msra.mxu0 0
        %806 = vmatprep.subr.bf16.mxu0 0
        %807 = vmatpush1.bf16.msra.mxu0 0
        %808 = vmatprep.subr.bf16.mxu0 0
        %809 = vmatpush1.bf16.msra.mxu0 0
        %810 = vmatprep.subr.bf16.mxu0 0
        %811 = vmatpush1.bf16.msra.mxu0 0
        %812 = vmatprep.subr.bf16.mxu0 0
        %813 = vmatpush1.bf16.msra.mxu0 0
        %814 = vmatprep.subr.bf16.mxu0 0
        %815 = vmatpush1.bf16.msra.mxu0 0
        %816 = vmatprep.mubr.bf16.mxu0 0
        %817 = vmatmul.mubr.bf16.gmra.mrb[0].mxu0 %v779
        %v818 = vpop.f32.mrb[0].mxu0
        %v819 = vadd.f32 0.0, %v818
        %v820 = vpop.f32.mrb[0].mxu0
        %v821 = vpop.f32.mrb[0].mxu0
        %v822 = vpop.f32.mrb[0].mxu0
        %823 = vdwg.mxu0
        %v825 = vsel %vm605, %v725, 0
        %v828 = vsel %vm734, %v729, 0
        %830 = vmatprep.subr.bf16.mxu0 0
        %831 = vmatpush1.bf16.msra.mxu0 %v828
        %832 = vmatprep.subr.bf16.mxu0 0
        %833 = vmatpush1.bf16.msra.mxu0 0
        %834 = vmatprep.subr.bf16.mxu0 0
        %835 = vmatpush1.bf16.msra.mxu0 0
        %836 = vmatprep.subr.bf16.mxu0 0
        %837 = vmatpush1.bf16.msra.mxu0 0
        %838 = vmatprep.subr.bf16.mxu0 0
        %839 = vmatpush1.bf16.msra.mxu0 0
        %840 = vmatprep.subr.bf16.mxu0 0
        %841 = vmatpush1.bf16.msra.mxu0 0
        %842 = vmatprep.subr.bf16.mxu0 0
        %843 = vmatpush1.bf16.msra.mxu0 0
        %844 = vmatprep.subr.bf16.mxu0 0
        %845 = vmatpush1.bf16.msra.mxu0 0
        %846 = vmatprep.subr.bf16.mxu0 0
        %847 = vmatpush1.bf16.msra.mxu0 0
        %848 = vmatprep.subr.bf16.mxu0 0
        %849 = vmatpush1.bf16.msra.mxu0 0
        %850 = vmatprep.subr.bf16.mxu0 0
        %851 = vmatpush1.bf16.msra.mxu0 0
        %852 = vmatprep.subr.bf16.mxu0 0
        %853 = vmatpush1.bf16.msra.mxu0 0
        %854 = vmatprep.subr.bf16.mxu0 0
        %855 = vmatpush1.bf16.msra.mxu0 0
        %856 = vmatprep.subr.bf16.mxu0 0
        %857 = vmatpush1.bf16.msra.mxu0 0
        %858 = vmatprep.subr.bf16.mxu0 0
        %859 = vmatpush1.bf16.msra.mxu0 0
        %860 = vmatprep.subr.bf16.mxu0 0
        %861 = vmatpush1.bf16.msra.mxu0 0
        %862 = vmatprep.mubr.bf16.mxu0 0
        %863 = vmatmul.mubr.bf16.gmra.mrb[0].mxu0 %v825
        %v864 = vpop.f32.mrb[0].mxu0
        %v865 = vadd.f32 0.0, %v864
        %v866 = vpop.f32.mrb[0].mxu0
        %v867 = vpop.f32.mrb[0].mxu0
        %v868 = vpop.f32.mrb[0].mxu0
        %869 = vdwg.mxu0
        %v871 = vsel %vm605, %v726, 0
        %v874 = vsel %vm734, %v730, 0
        %876 = vmatprep.subr.bf16.mxu0 0
        %877 = vmatpush1.bf16.msra.mxu0 %v874
        %878 = vmatprep.subr.bf16.mxu0 0
        %879 = vmatpush1.bf16.msra.mxu0 0
        %880 = vmatprep.subr.bf16.mxu0 0
        %881 = vmatpush1.bf16.msra.mxu0 0
        %882 = vmatprep.subr.bf16.mxu0 0
        %883 = vmatpush1.bf16.msra.mxu0 0
        %884 = vmatprep.subr.bf16.mxu0 0
        %885 = vmatpush1.bf16.msra.mxu0 0
        %886 = vmatprep.subr.bf16.mxu0 0
        %887 = vmatpush1.bf16.msra.mxu0 0
        %888 = vmatprep.subr.bf16.mxu0 0
        %889 = vmatpush1.bf16.msra.mxu0 0
        %890 = vmatprep.subr.bf16.mxu0 0
        %891 = vmatpush1.bf16.msra.mxu0 0
        %892 = vmatprep.subr.bf16.mxu0 0
        %893 = vmatpush1.bf16.msra.mxu0 0
        %894 = vmatprep.subr.bf16.mxu0 0
        %895 = vmatpush1.bf16.msra.mxu0 0
        %896 = vmatprep.subr.bf16.mxu0 0
        %897 = vmatpush1.bf16.msra.mxu0 0
        %898 = vmatprep.subr.bf16.mxu0 0
        %899 = vmatpush1.bf16.msra.mxu0 0
        %900 = vmatprep.subr.bf16.mxu0 0
        %901 = vmatpush1.bf16.msra.mxu0 0
        %902 = vmatprep.subr.bf16.mxu0 0
        %903 = vmatpush1.bf16.msra.mxu0 0
        %904 = vmatprep.subr.bf16.mxu0 0
        %905 = vmatpush1.bf16.msra.mxu0 0
        %906 = vmatprep.subr.bf16.mxu0 0
        %907 = vmatpush1.bf16.msra.mxu0 0
        %908 = vmatprep.mubr.bf16.mxu0 0
        %909 = vmatmul.mubr.bf16.gmra.mrb[0].mxu0 %v871
        %v910 = vpop.f32.mrb[0].mxu0
        %v911 = vadd.f32 0.0, %v910
        %v912 = vpop.f32.mrb[0].mxu0
        %v913 = vpop.f32.mrb[0].mxu0
        %v914 = vpop.f32.mrb[0].mxu0
        %915 = vdwg.mxu0
        %v916 = vadd.f32 %v719, %v773
        %v917 = vadd.f32 %v720, %v819
        %v918 = vadd.f32 %v721, %v865
        %v919 = vadd.f32 %v722, %v911
        %920 = vst.msk [vmem:[#allocation5] sm:$0xff] %vm405, %v916
        %921 = vst.msk [vmem:[#allocation5 + $0x8] sm:$0xff] %vm405, %v917
        %922 = vst.msk [vmem:[#allocation5 + $0x10] sm:$0xff] %vm405, %v918
        %923 = vst.msk [vmem:[#allocation5 + $0x18] sm:$0xff] %vm405, %v919
        %924 = vst.msk [vmem:[#allocation3] sm:$0xff] %vm690, %v618
        %925 = vst.msk [vmem:[#allocation3 + $0x8] sm:$0xff] %vm690, %v619
        %926 = vst.msk [vmem:[#allocation3 + $0x10] sm:$0xff] %vm690, %v620
        %927 = vst.msk [vmem:[#allocation3 + $0x18] sm:$0xff] %vm690, %v621
        // Predicated region
        $region53: #{tpu_custom_call.1} parent=35 // pred_check
          %p928 = pneg %p366
        $region54: #{tpu_custom_call.1} parent=35 // pred_check_branch
          %930 = sbr.rel (%p928) target = $region56
        $region55: #{tpu_custom_call.1} parent=35 // pred_region
          %v931 = vld [vmem:[#allocation5] sm:$0xff]
          %v932 = vld [vmem:[#allocation5 + $0x8] sm:$0xff]
          %v933 = vld [vmem:[#allocation5 + $0x10] sm:$0xff]
          %v934 = vld [vmem:[#allocation5 + $0x18] sm:$0xff]
          %v935 = vld [vmem:[#allocation4] sm:$0xff]
          %v936 = vld [vmem:[#allocation4 + $0x8] sm:$0xff]
          %v937 = vld [vmem:[#allocation4 + $0x10] sm:$0xff]
          %v938 = vld [vmem:[#allocation4 + $0x18] sm:$0xff]
          %940 = vset.pattern.permute.xlu0 0
          %941 = vperm.xlu0 %940, %v935
          %v942 = vpop.permute.xlu0 %941
          %945 = vset.pattern.permute.xlu0 0
          %946 = vperm.xlu0 %945, %v936
          %v947 = vpop.permute.xlu0 %946
          %950 = vset.pattern.permute.xlu0 0
          %951 = vperm.xlu0 %950, %v937
          %v952 = vpop.permute.xlu0 %951
          %955 = vset.pattern.permute.xlu0 0
          %956 = vperm.xlu0 %955, %v938
          %v957 = vpop.permute.xlu0 %956
          %v959 = vrcp.pop %v942
          %v960 = vmul.f32 %v931, %v959
          %v961 = vrcp.pop %v947
          %v962 = vmul.f32 %v932, %v961
          %v963 = vrcp.pop %v952
          %v964 = vmul.f32 %v933, %v963
          %v965 = vrcp.pop %v957
          %v966 = vmul.f32 %v934, %v965
          %967 = vst.msk [vmem:[%s351] sm:$0xff] %vm405, %v960
          %968 = vst.msk [vmem:[%s351 + $0x8] sm:$0xff] %vm405, %v962
          %969 = vst.msk [vmem:[%s351 + $0x10] sm:$0xff] %vm405, %v964
          %970 = vst.msk [vmem:[%s351 + $0x18] sm:$0xff] %vm405, %v966
        $region56: #{tpu_custom_call.1} parent=35 // pred_fallthru
          _
        %s971 = sand.u32 %s167, 1
        %s972 = scalar_lea.sflag [#allocation8], %s971
        %s973 = sand.u32 %s167, 1
        %s974 = smul.addr %s973, 32
        %s975 = scalar_lea.vmem [#allocation12], %s974
        // Predicated region
        $region57: #{tpu_custom_call.1} parent=35 // pred_check
          %p976 = pneg %p177
        $region58: #{tpu_custom_call.1} parent=35 // pred_check_branch
          %978 = sbr.rel (%p976) target = $region60
        $region59: #{tpu_custom_call.1} parent=35 // pred_region
          %s980 = ssub.s32 512, 512
          %981 = vsyncadd %s972, %s980
          %s982 = smul.addr %s29, 4
          %s983 = sadd.s32 %s30, %s982
          %s984 = smul.addr %s983, 128
          %s985 = scalar_lea.hbm %s4, %s984
          %s986 = sshll.u32 %s975, 4
          %s987 = int_to_ptr.vmem [resolvable:$true] %s986
          %992 = dma.vmem_to_hbm [thread:$0]  %s987, 512, %s985, %s972, 128, 128, 8
        $region60: #{tpu_custom_call.1} parent=35 // pred_fallthru
          _
      $region36: #{tpu_custom_call.1} parent=5 // pred_fallthru
        _
      %p993 = scmp.le.s32.totalorder 2, %s19
      // Predicated region
      $region61: #{tpu_custom_call.1} parent=5 // pred_check
        %p994 = pneg %p993
      $region62: #{tpu_custom_call.1} parent=5 // pred_check_branch
        %996 = sbr.rel (%p994) target = $region64
      $region63: #{tpu_custom_call.1} parent=5 // pred_region
        %s997 = ssub.s32 %s19, 2
        // Predicated region
        $region65: #{tpu_custom_call.1} parent=63 // pred_check
          %p998 = pneg %p183
        $region66: #{tpu_custom_call.1} parent=63 // pred_check_branch
          %1000 = sbr.rel (%p998) target = $region68
        $region67: #{tpu_custom_call.1} parent=63 // pred_region
          %s1001 = sand.u32 %s168, 1
          %s1002 = scalar_lea.sflag [#allocation8], %s1001
          %s1003 = sand.u32 %s168, 1
          %s1004 = smul.addr %s1003, 32
          %s1005 = scalar_lea.vmem [#allocation12], %s1004
          %1006 = dma.done %s1002, 512
        $region68: #{tpu_custom_call.1} parent=63 // pred_fallthru
          _
      $region64: #{tpu_custom_call.1} parent=5 // pred_fallthru
        _
    $region6: #{tpu_custom_call.1} parent=1 // loop_footer
      %s23 = sadd.s32 1, %s19
    $region7: #{tpu_custom_call.1} parent=1 // loop_footer_branch
      %18 = sbr.rel target = $region3
    $region8: #{tpu_custom_call.1} parent=1 // loop_exit
      _
    %1007 = vsyncpa [#allocation7], 1
    %s1008 = scalar_lea.sflag [#allocation7], 1
    %1009 = vsyncpa %s1008, 1
    %1010 = vsyncpa [#allocation10], 1
    %s1011 = scalar_lea.sflag [#allocation10], 1
    %1012 = vsyncpa %s1011, 1
    %1013 = vsyncpa [#allocation8], 1
    %s1014 = scalar_lea.sflag [#allocation8], 1
    %1015 = vsyncpa %s1014, 1

</llo_original>
